<compile_context>
chip_gen: v5e
topology: v5e:2x2
jax: 0.10.0
libtpu: 0.0.40
codegen_flags: <defaults>
</compile_context>

<pallas_src>
import functools

import jax
import jax.numpy as jnp
from jax.experimental import pallas as pl
from jax.experimental.pallas import tpu as pltpu


_VMEM = pl.BlockSpec(memory_space=pltpu.MemorySpace.VMEM)


# ----------------------- conv(3x3, pad=1) + ReLU + maxpool(2) ----------------------

def _conv_relu_pool_kernel(x_ref, w_ref, b_ref, o_ref, *, P):
    """x_ref: (4*P, 9*Cin) im2col rows grouped by pooling quadrant;
       w_ref: (9*Cin, Cout); b_ref: (1, Cout); o_ref: (P, Cout)."""
    acc = jnp.dot(x_ref[...], w_ref[...], preferred_element_type=jnp.float32)
    acc = jnp.maximum(acc + b_ref[...], 0.0)                      # bias + ReLU
    # 2x2 max-pool == max over the four contiguous quadrant row-blocks (all in registers).
    p0 = jnp.maximum(acc[0 * P:1 * P, :], acc[1 * P:2 * P, :])
    p1 = jnp.maximum(acc[2 * P:3 * P, :], acc[3 * P:4 * P, :])
    o_ref[...] = jnp.maximum(p0, p1)                              # single lane-contiguous store


def _im2col_quadrants(x_nhwc):
    """(N, H, W, Cin) -> (4*N*Ho*Wo, 9*Cin); rows ordered (qh, qw, n, ho, wo),
       columns ordered (dy, dx, c) to match w.reshape(9*Cin, Cout)."""
    N, H, W, Cin = x_nhwc.shape
    Ho, Wo = H // 2, W // 2
    xp = jnp.pad(x_nhwc, ((0, 0), (1, 1), (1, 1), (0, 0)))        # zero-pad H and W
    taps = [xp[:, dy:dy + H, dx:dx + W, :] for dy in range(3) for dx in range(3)]
    col = jnp.concatenate(taps, axis=-1)                          # (N, H, W, 9*Cin)
    col = col.reshape(N, Ho, 2, Wo, 2, 9 * Cin)
    col = col.transpose(2, 4, 0, 1, 3, 5)                         # (qh, qw, n, ho, wo, 9*Cin)
    return col.reshape(4 * N * Ho * Wo, 9 * Cin)


def conv3x3_relu_pool(x_nhwc, w, b):
    """x_nhwc: (N, H, W, Cin) f32; w: (3, 3, Cin, Cout); b: (Cout,).
       Returns (N, H//2, W//2, Cout) f32 == Conv2d(pad=1) + ReLU + MaxPool2d(2)."""
    N, H, W, Cin = x_nhwc.shape
    Cout = w.shape[-1]
    Ho, Wo = H // 2, W // 2
    P = N * Ho * Wo

    cols = _im2col_quadrants(x_nhwc)                              # (4*P, 9*Cin)
    w2d = w.reshape(9 * Cin, Cout)                                # rows ordered (dy, dx, c)

    out = pl.pallas_call(
        functools.partial(_conv_relu_pool_kernel, P=P),
        out_shape=jax.ShapeDtypeStruct((P, Cout), jnp.float32),
        in_specs=[_VMEM, _VMEM, _VMEM],
        out_specs=_VMEM,
    )(cols, w2d, b.reshape(1, Cout))
    return out.reshape(N, Ho, Wo, Cout)                           # rows were (n, ho, wo)


# ------------------------------------ FC head ---------------------------------------

def _mlp_kernel(x_ref, w1_ref, b1_ref, w2_ref, b2_ref, w3_ref, b3_ref, o_ref):
    h = jnp.dot(x_ref[...], w1_ref[...], preferred_element_type=jnp.float32) + b1_ref[...]
    h = jnp.maximum(h, 0.0)
    h = jnp.dot(h, w2_ref[...], preferred_element_type=jnp.float32) + b2_ref[...]
    h = jnp.maximum(h, 0.0)
    o_ref[...] = jnp.dot(h, w3_ref[...], preferred_element_type=jnp.float32) + b3_ref[...]


def mlp_forward(x, w1, params):
    N = x.shape[0]
    out_dim = params["fc3_w"].shape[1]
    return pl.pallas_call(
        _mlp_kernel,
        out_shape=jax.ShapeDtypeStruct((N, out_dim), jnp.float32),
        in_specs=[_VMEM] * 7,
        out_specs=_VMEM,
    )(x, w1, params["fc1_b"].reshape(1, -1),
      params["fc2_w"], params["fc2_b"].reshape(1, -1),
      params["fc3_w"], params["fc3_b"].reshape(1, -1))


# -------------------------------- full forward pass ---------------------------------

@jax.jit
def neural_network_forward(x_nchw, params):
    x = jnp.transpose(x_nchw, (0, 2, 3, 1)).astype(jnp.float32)   # NCHW -> NHWC (tiny)
    x = conv3x3_relu_pool(x, params["conv1_w"], params["conv1_b"])
    x = conv3x3_relu_pool(x, params["conv2_w"], params["conv2_b"])
    N, Ho, Wo, C = x.shape
    x = x.reshape(N, Ho * Wo * C)                                 # (h, w, c) ordering, no transpose
    # Absorb PyTorch's (c, h, w) flatten order into fc1's weight rows instead of
    # transposing the activations.
    w1 = params["fc1_w"].reshape(C, Ho, Wo, -1).transpose(1, 2, 0, 3)
    w1 = w1.reshape(Ho * Wo * C, -1)
    return mlp_forward(x, w1, params)


# -------------------------------- params & reference --------------------------------

def init_params(key, in_hw=16):
    feat = 32 * (in_hw // 4) * (in_hw // 4)   # 512 for 16x16 input (131072 for 256x256)
    ks = jax.random.split(key, 10)

    def u(k, shape, fan_in):
        bound = 1.0 / (fan_in ** 0.5)
        return jax.random.uniform(k, shape, jnp.float32, -bound, bound)

    return {
        "conv1_w": u(ks[0], (3, 3, 3, 32), 3 * 9),
        "conv1_b": u(ks[1], (32,), 3 * 9),
        "conv2_w": u(ks[2], (3, 3, 32, 32), 32 * 9),
        "conv2_b": u(ks[3], (32,), 32 * 9),
        "fc1_w": u(ks[4], (feat, 32), feat),
        "fc1_b": u(ks[5], (32,), feat),
        "fc2_w": u(ks[6], (32, 16), 32),
        "fc2_b": u(ks[7], (16,), 32),
        "fc3_w": u(ks[8], (16, 4), 16),
        "fc3_b": u(ks[9], (4,), 16),
    }


def reference_forward(x_nchw, params):
    """Pure-JAX reference with PyTorch semantics (sanity check)."""
    x = jnp.transpose(x_nchw, (0, 2, 3, 1)).astype(jnp.float32)

    def block(x, w, b):
        N, H, W, Cin = x.shape
        Cout = w.shape[-1]
        xp = jnp.pad(x, ((0, 0), (1, 1), (1, 1), (0, 0)))
        acc = jnp.zeros((N, H, W, Cout), jnp.float32)
        for dy in range(3):
            for dx in range(3):
                acc = acc + jnp.einsum("nhwc,co->nhwo",
                                       xp[:, dy:dy + H, dx:dx + W, :], w[dy, dx],
                                       precision=jax.lax.Precision.HIGHEST)
        acc = jnp.maximum(acc + b, 0.0)
        return acc.reshape(N, H // 2, 2, W // 2, 2, Cout).max(axis=(2, 4))

    x = block(x, params["conv1_w"], params["conv1_b"])
    x = block(x, params["conv2_w"], params["conv2_b"])
    n = x.shape[0]
    x = jnp.transpose(x, (0, 3, 1, 2)).reshape(n, -1)             # PyTorch flatten order
    hi = jax.lax.Precision.HIGHEST
    h = jnp.maximum(jnp.dot(x, params["fc1_w"], precision=hi) + params["fc1_b"], 0.0)
    h = jnp.maximum(jnp.dot(h, params["fc2_w"], precision=hi) + params["fc2_b"], 0.0)
    return jnp.dot(h, params["fc3_w"], precision=hi) + params["fc3_b"]


if __name__ == "__main__":
    key = jax.random.PRNGKey(0)
    kx, kp = jax.random.split(key)
    x = jax.random.normal(kx, (2, 3, 16, 16), jnp.float32)        # NCHW, small shapes
    params = init_params(kp, in_hw=16)

    out = jax.block_until_ready(neural_network_forward(x, params))
    assert out.shape == (2, 4), out.shape

    ref = reference_forward(x, params)
    if not jnp.allclose(out, ref, atol=2e-2, rtol=2e-2):
        raise AssertionError("Pallas output does not match JAX reference")

    print("KERNEL_OK")
</pallas_src>

<mosaic_0001>
module attributes {stable_mosaic.version = 11 : i64} {
  func.func @_conv_relu_pool_kernel(%arg0: memref<512x27xf32, #tpu.memory_space<vmem>>, %arg1: memref<27x32xf32, #tpu.memory_space<vmem>>, %arg2: memref<1x32xf32, #tpu.memory_space<vmem>>, %arg3: memref<128x32xf32, #tpu.memory_space<vmem>>) attributes {dimension_semantics = [], scalar_prefetch = 0 : i64, scratch_operands = 0 : i64, tpu.core_type = #tpu.core_type<tc>} {
    %c0 = arith.constant 0 : index
    %c0_0 = arith.constant 0 : index
    %0 = vector.load %arg0[%c0, %c0_0] : memref<512x27xf32, #tpu.memory_space<vmem>>, vector<512x27xf32>
    %c0_1 = arith.constant 0 : index
    %c0_2 = arith.constant 0 : index
    %1 = vector.load %arg1[%c0_1, %c0_2] : memref<27x32xf32, #tpu.memory_space<vmem>>, vector<27x32xf32>
    %cst = arith.constant dense<0.000000e+00> : vector<512x32xf32>
    %2 = tpu.matmul %0, %1, %cst {dimension_numbers = #tpu.dot_dimension_numbers<[1], [0], [0], [1], [0, 0, 1, 1], [], []>} : vector<512x27xf32>, vector<27x32xf32>, vector<512x32xf32> -> vector<512x32xf32>
    %c0_3 = arith.constant 0 : index
    %c0_4 = arith.constant 0 : index
    %3 = vector.load %arg2[%c0_3, %c0_4] : memref<1x32xf32, #tpu.memory_space<vmem>>, vector<1x32xf32>
    %4 = vector.broadcast %3 : vector<1x32xf32> to vector<512x32xf32>
    %5 = arith.addf %2, %4 : vector<512x32xf32>
    %cst_5 = arith.constant 0.000000e+00 : f32
    %6 = vector.broadcast %cst_5 : f32 to vector<512x32xf32>
    %7 = arith.maximumf %5, %6 : vector<512x32xf32>
    %8 = vector.extract_strided_slice %7 {offsets = [0, 0], sizes = [128, 32], strides = [1, 1]} : vector<512x32xf32> to vector<128x32xf32>
    %9 = vector.extract_strided_slice %7 {offsets = [128, 0], sizes = [128, 32], strides = [1, 1]} : vector<512x32xf32> to vector<128x32xf32>
    %10 = arith.maximumf %8, %9 : vector<128x32xf32>
    %11 = vector.extract_strided_slice %7 {offsets = [256, 0], sizes = [128, 32], strides = [1, 1]} : vector<512x32xf32> to vector<128x32xf32>
    %12 = vector.extract_strided_slice %7 {offsets = [384, 0], sizes = [128, 32], strides = [1, 1]} : vector<512x32xf32> to vector<128x32xf32>
    %13 = arith.maximumf %11, %12 : vector<128x32xf32>
    %14 = arith.maximumf %10, %13 : vector<128x32xf32>
    %c0_6 = arith.constant 0 : index
    %c0_7 = arith.constant 0 : index
    %15 = vector.load %arg3[%c0_6, %c0_7] : memref<128x32xf32, #tpu.memory_space<vmem>>, vector<128x32xf32>
    tpu.vector_store %arg3[%c0_6, %c0_7], %14 {strides = array<i32>} : memref<128x32xf32, #tpu.memory_space<vmem>>, vector<128x32xf32>,
    return
  }
}

module attributes {stable_mosaic.version = 11 : i64} {
  func.func @_conv_relu_pool_kernel(%arg0: memref<128x288xf32, #tpu.memory_space<vmem>>, %arg1: memref<288x32xf32, #tpu.memory_space<vmem>>, %arg2: memref<1x32xf32, #tpu.memory_space<vmem>>, %arg3: memref<32x32xf32, #tpu.memory_space<vmem>>) attributes {dimension_semantics = [], scalar_prefetch = 0 : i64, scratch_operands = 0 : i64, tpu.core_type = #tpu.core_type<tc>} {
    %c0 = arith.constant 0 : index
    %c0_0 = arith.constant 0 : index
    %0 = vector.load %arg0[%c0, %c0_0] : memref<128x288xf32, #tpu.memory_space<vmem>>, vector<128x288xf32>
    %c0_1 = arith.constant 0 : index
    %c0_2 = arith.constant 0 : index
    %1 = vector.load %arg1[%c0_1, %c0_2] : memref<288x32xf32, #tpu.memory_space<vmem>>, vector<288x32xf32>
    %cst = arith.constant dense<0.000000e+00> : vector<128x32xf32>
    %2 = tpu.matmul %0, %1, %cst {dimension_numbers = #tpu.dot_dimension_numbers<[1], [0], [0], [1], [0, 0, 1, 1], [], []>} : vector<128x288xf32>, vector<288x32xf32>, vector<128x32xf32> -> vector<128x32xf32>
    %c0_3 = arith.constant 0 : index
    %c0_4 = arith.constant 0 : index
    %3 = vector.load %arg2[%c0_3, %c0_4] : memref<1x32xf32, #tpu.memory_space<vmem>>, vector<1x32xf32>
    %4 = vector.broadcast %3 : vector<1x32xf32> to vector<128x32xf32>
    %5 = arith.addf %2, %4 : vector<128x32xf32>
    %cst_5 = arith.constant 0.000000e+00 : f32
    %6 = vector.broadcast %cst_5 : f32 to vector<128x32xf32>
    %7 = arith.maximumf %5, %6 : vector<128x32xf32>
    %8 = vector.extract_strided_slice %7 {offsets = [0, 0], sizes = [32, 32], strides = [1, 1]} : vector<128x32xf32> to vector<32x32xf32>
    %9 = vector.extract_strided_slice %7 {offsets = [32, 0], sizes = [32, 32], strides = [1, 1]} : vector<128x32xf32> to vector<32x32xf32>
    %10 = arith.maximumf %8, %9 : vector<32x32xf32>
    %11 = vector.extract_strided_slice %7 {offsets = [64, 0], sizes = [32, 32], strides = [1, 1]} : vector<128x32xf32> to vector<32x32xf32>
    %12 = vector.extract_strided_slice %7 {offsets = [96, 0], sizes = [32, 32], strides = [1, 1]} : vector<128x32xf32> to vector<32x32xf32>
    %13 = arith.maximumf %11, %12 : vector<32x32xf32>
    %14 = arith.maximumf %10, %13 : vector<32x32xf32>
    %c0_6 = arith.constant 0 : index
    %c0_7 = arith.constant 0 : index
    %15 = vector.load %arg3[%c0_6, %c0_7] : memref<32x32xf32, #tpu.memory_space<vmem>>, vector<32x32xf32>
    tpu.vector_store %arg3[%c0_6, %c0_7], %14 {strides = array<i32>} : memref<32x32xf32, #tpu.memory_space<vmem>>, vector<32x32xf32>,
    return
  }
}

module attributes {stable_mosaic.version = 11 : i64} {
  func.func @_mlp_kernel(%arg0: memref<2x512xf32, #tpu.memory_space<vmem>>, %arg1: memref<512x32xf32, #tpu.memory_space<vmem>>, %arg2: memref<1x32xf32, #tpu.memory_space<vmem>>, %arg3: memref<32x16xf32, #tpu.memory_space<vmem>>, %arg4: memref<1x16xf32, #tpu.memory_space<vmem>>, %arg5: memref<16x4xf32, #tpu.memory_space<vmem>>, %arg6: memref<1x4xf32, #tpu.memory_space<vmem>>, %arg7: memref<2x4xf32, #tpu.memory_space<vmem>>) attributes {dimension_semantics = [], scalar_prefetch = 0 : i64, scratch_operands = 0 : i64, tpu.core_type = #tpu.core_type<tc>} {
    %c0 = arith.constant 0 : index
    %c0_0 = arith.constant 0 : index
    %0 = vector.load %arg0[%c0, %c0_0] : memref<2x512xf32, #tpu.memory_space<vmem>>, vector<2x512xf32>
    %c0_1 = arith.constant 0 : index
    %c0_2 = arith.constant 0 : index
    %1 = vector.load %arg1[%c0_1, %c0_2] : memref<512x32xf32, #tpu.memory_space<vmem>>, vector<512x32xf32>
    %cst = arith.constant dense<0.000000e+00> : vector<2x32xf32>
    %2 = tpu.matmul %0, %1, %cst {dimension_numbers = #tpu.dot_dimension_numbers<[1], [0], [0], [1], [0, 0, 1, 1], [], []>} : vector<2x512xf32>, vector<512x32xf32>, vector<2x32xf32> -> vector<2x32xf32>
    %c0_3 = arith.constant 0 : index
    %c0_4 = arith.constant 0 : index
    %3 = vector.load %arg2[%c0_3, %c0_4] : memref<1x32xf32, #tpu.memory_space<vmem>>, vector<1x32xf32>
    %4 = vector.broadcast %3 : vector<1x32xf32> to vector<2x32xf32>
    %5 = arith.addf %2, %4 : vector<2x32xf32>
    %cst_5 = arith.constant 0.000000e+00 : f32
    %6 = vector.broadcast %cst_5 : f32 to vector<2x32xf32>
    %7 = arith.maximumf %5, %6 : vector<2x32xf32>
    %c0_6 = arith.constant 0 : index
    %c0_7 = arith.constant 0 : index
    %8 = vector.load %arg3[%c0_6, %c0_7] : memref<32x16xf32, #tpu.memory_space<vmem>>, vector<32x16xf32>
    %cst_8 = arith.constant dense<0.000000e+00> : vector<2x16xf32>
    %9 = tpu.matmul %7, %8, %cst_8 {dimension_numbers = #tpu.dot_dimension_numbers<[1], [0], [0], [1], [0, 0, 1, 1], [], []>} : vector<2x32xf32>, vector<32x16xf32>, vector<2x16xf32> -> vector<2x16xf32>
    %c0_9 = arith.constant 0 : index
    %c0_10 = arith.constant 0 : index
    %10 = vector.load %arg4[%c0_9, %c0_10] : memref<1x16xf32, #tpu.memory_space<vmem>>, vector<1x16xf32>
    %11 = vector.broadcast %10 : vector<1x16xf32> to vector<2x16xf32>
    %12 = arith.addf %9, %11 : vector<2x16xf32>
    %cst_11 = arith.constant 0.000000e+00 : f32
    %13 = vector.broadcast %cst_11 : f32 to vector<2x16xf32>
    %14 = arith.maximumf %12, %13 : vector<2x16xf32>
    %c0_12 = arith.constant 0 : index
    %c0_13 = arith.constant 0 : index
    %15 = vector.load %arg5[%c0_12, %c0_13] : memref<16x4xf32, #tpu.memory_space<vmem>>, vector<16x4xf32>
    %cst_14 = arith.constant dense<0.000000e+00> : vector<2x4xf32>
    %16 = tpu.matmul %14, %15, %cst_14 {dimension_numbers = #tpu.dot_dimension_numbers<[1], [0], [0], [1], [0, 0, 1, 1], [], []>} : vector<2x16xf32>, vector<16x4xf32>, vector<2x4xf32> -> vector<2x4xf32>
    %c0_15 = arith.constant 0 : index
    %c0_16 = arith.constant 0 : index
    %17 = vector.load %arg6[%c0_15, %c0_16] : memref<1x4xf32, #tpu.memory_space<vmem>>, vector<1x4xf32>
    %18 = vector.broadcast %17 : vector<1x4xf32> to vector<2x4xf32>
    %19 = arith.addf %16, %18 : vector<2x4xf32>
    %c0_17 = arith.constant 0 : index
    %c0_18 = arith.constant 0 : index
    %20 = vector.load %arg7[%c0_17, %c0_18] : memref<2x4xf32, #tpu.memory_space<vmem>>, vector<2x4xf32>
    tpu.vector_store %arg7[%c0_17, %c0_18], %19 {strides = array<i32>} : memref<2x4xf32, #tpu.memory_space<vmem>>, vector<2x4xf32>,
    return
  }
}

</mosaic_0001>

<llo_original>
// kernel: neural_network_forward.3
$region0: #{neural_network_forward.3}
  #allocation0 [shape = 'u32[]', space=smem, size = 0x4, offset = 0x4, fixed_abs, tag = 'smem constant byte address 0x4 - core index']
  #allocation1 [shape = 'u32[72,128]{1,0:T(1,128)}', space=vmem, size = 0x9000, scoped, tag = 'internal scratch']
  %s0 = inlined_call_operand.vmem [shape: f32[512,27], index: 0, kind: input, shape index: {}]
  %s1 = inlined_call_operand.vmem [shape: f32[27,32], index: 1, kind: input, shape index: {}]
  %s2 = inlined_call_operand.vmem [shape: f32[1,32], index: 2, kind: input, shape index: {}]
  %s3 = inlined_call_operand.vmem [shape: f32[128,32], index: 3, kind: output, shape index: {}]
  %s4 = sld [smem:[#allocation0]]
  $region22: #{neural_network_forward.3} parent=0
    _
  %s6 = ssub.s32 1, %s4
  %s7 = scalar_select 0, %s6, %s4
  // Predicated region
  $region2: #{neural_network_forward.3} parent=0 // pred_check
    _
  $region3: #{neural_network_forward.3} parent=0 // pred_check_branch
    %9 = sbr.rel (0) target = $region5
  $region4: #{neural_network_forward.3} parent=0 // pred_region
    _
  $region5: #{neural_network_forward.3} parent=0 // pred_fallthru
    _
  // Predicated region
  $region6: #{neural_network_forward.3} parent=0 // pred_check
    _
  $region7: #{neural_network_forward.3} parent=0 // pred_check_branch
    %11 = sbr.rel (0) target = $region9
  $region8: #{neural_network_forward.3} parent=0 // pred_region
    _
  $region9: #{neural_network_forward.3} parent=0 // pred_fallthru
    _
  // Predicated region
  $region10: #{neural_network_forward.3} parent=0 // pred_check
    _
  $region11: #{neural_network_forward.3} parent=0 // pred_check_branch
    %13 = sbr.rel (0) target = $region13
  $region12: #{neural_network_forward.3} parent=0 // pred_region
    _
  $region13: #{neural_network_forward.3} parent=0 // pred_fallthru
    _
  %v14 = vld [vmem:[%s0] sm:$0xff]
  %v15 = vld [vmem:[%s0 + $0x8] sm:$0xff]
  %v16 = vld [vmem:[%s0 + $0x10] sm:$0xff]
  %v17 = vld [vmem:[%s0 + $0x18] sm:$0xff]
  %v18 = vld [vmem:[%s0 + $0x20] sm:$0xff]
  %v19 = vld [vmem:[%s0 + $0x28] sm:$0xff]
  %v20 = vld [vmem:[%s0 + $0x30] sm:$0xff]
  %v21 = vld [vmem:[%s0 + $0x38] sm:$0xff]
  %v22 = vld [vmem:[%s0 + $0x40] sm:$0xff]
  %v23 = vld [vmem:[%s0 + $0x48] sm:$0xff]
  %v24 = vld [vmem:[%s0 + $0x50] sm:$0xff]
  %v25 = vld [vmem:[%s0 + $0x58] sm:$0xff]
  %v26 = vld [vmem:[%s0 + $0x60] sm:$0xff]
  %v27 = vld [vmem:[%s0 + $0x68] sm:$0xff]
  %v28 = vld [vmem:[%s0 + $0x70] sm:$0xff]
  %v29 = vld [vmem:[%s0 + $0x78] sm:$0xff]
  %v30 = vld [vmem:[%s0 + $0x80] sm:$0xff]
  %v31 = vld [vmem:[%s0 + $0x88] sm:$0xff]
  %v32 = vld [vmem:[%s0 + $0x90] sm:$0xff]
  %v33 = vld [vmem:[%s0 + $0x98] sm:$0xff]
  %v34 = vld [vmem:[%s0 + $0xa0] sm:$0xff]
  %v35 = vld [vmem:[%s0 + $0xa8] sm:$0xff]
  %v36 = vld [vmem:[%s0 + $0xb0] sm:$0xff]
  %v37 = vld [vmem:[%s0 + $0xb8] sm:$0xff]
  %v38 = vld [vmem:[%s0 + $0xc0] sm:$0xff]
  %v39 = vld [vmem:[%s0 + $0xc8] sm:$0xff]
  %v40 = vld [vmem:[%s0 + $0xd0] sm:$0xff]
  %v41 = vld [vmem:[%s0 + $0xd8] sm:$0xff]
  %v42 = vld [vmem:[%s0 + $0xe0] sm:$0xff]
  %v43 = vld [vmem:[%s0 + $0xe8] sm:$0xff]
  %v44 = vld [vmem:[%s0 + $0xf0] sm:$0xff]
  %v45 = vld [vmem:[%s0 + $0xf8] sm:$0xff]
  %v46 = vld [vmem:[%s0 + $0x100] sm:$0xff]
  %v47 = vld [vmem:[%s0 + $0x108] sm:$0xff]
  %v48 = vld [vmem:[%s0 + $0x110] sm:$0xff]
  %v49 = vld [vmem:[%s0 + $0x118] sm:$0xff]
  %v50 = vld [vmem:[%s0 + $0x120] sm:$0xff]
  %v51 = vld [vmem:[%s0 + $0x128] sm:$0xff]
  %v52 = vld [vmem:[%s0 + $0x130] sm:$0xff]
  %v53 = vld [vmem:[%s0 + $0x138] sm:$0xff]
  %v54 = vld [vmem:[%s0 + $0x140] sm:$0xff]
  %v55 = vld [vmem:[%s0 + $0x148] sm:$0xff]
  %v56 = vld [vmem:[%s0 + $0x150] sm:$0xff]
  %v57 = vld [vmem:[%s0 + $0x158] sm:$0xff]
  %v58 = vld [vmem:[%s0 + $0x160] sm:$0xff]
  %v59 = vld [vmem:[%s0 + $0x168] sm:$0xff]
  %v60 = vld [vmem:[%s0 + $0x170] sm:$0xff]
  %v61 = vld [vmem:[%s0 + $0x178] sm:$0xff]
  %v62 = vld [vmem:[%s0 + $0x180] sm:$0xff]
  %v63 = vld [vmem:[%s0 + $0x188] sm:$0xff]
  %v64 = vld [vmem:[%s0 + $0x190] sm:$0xff]
  %v65 = vld [vmem:[%s0 + $0x198] sm:$0xff]
  %v66 = vld [vmem:[%s0 + $0x1a0] sm:$0xff]
  %v67 = vld [vmem:[%s0 + $0x1a8] sm:$0xff]
  %v68 = vld [vmem:[%s0 + $0x1b0] sm:$0xff]
  %v69 = vld [vmem:[%s0 + $0x1b8] sm:$0xff]
  %v70 = vld [vmem:[%s0 + $0x1c0] sm:$0xff]
  %v71 = vld [vmem:[%s0 + $0x1c8] sm:$0xff]
  %v72 = vld [vmem:[%s0 + $0x1d0] sm:$0xff]
  %v73 = vld [vmem:[%s0 + $0x1d8] sm:$0xff]
  %v74 = vld [vmem:[%s0 + $0x1e0] sm:$0xff]
  %v75 = vld [vmem:[%s0 + $0x1e8] sm:$0xff]
  %v76 = vld [vmem:[%s0 + $0x1f0] sm:$0xff]
  %v77 = vld [vmem:[%s0 + $0x1f8] sm:$0xff]
  %v78 = vld [vmem:[%s1] sm:$0xff]
  %v79 = vld [vmem:[%s1 + $0x8] sm:$0xff]
  %v80 = vld [vmem:[%s1 + $0x10] sm:$0xff]
  %v81 = vld [vmem:[%s1 + $0x18] sm:$0x7]
  %v82 = vld [vmem:[%s2] sm:$0x1]
  %v84 = vperm.slane %v82, 0
  %vm86 = vcmask 220160
  %v88 = vsel %vm86, %v14, 0
  %v91 = vsel %vm86, %v15, 0
  %v94 = vsel %vm86, %v16, 0
  %v97 = vsel %vm86, %v17, 0
  %v100 = vsel %vm86, %v18, 0
  %v103 = vsel %vm86, %v19, 0
  %v106 = vsel %vm86, %v20, 0
  %v109 = vsel %vm86, %v21, 0
  %v112 = vsel %vm86, %v22, 0
  %v115 = vsel %vm86, %v23, 0
  %v118 = vsel %vm86, %v24, 0
  %v121 = vsel %vm86, %v25, 0
  %v124 = vsel %vm86, %v26, 0
  %v127 = vsel %vm86, %v27, 0
  %v130 = vsel %vm86, %v28, 0
  %v133 = vsel %vm86, %v29, 0
  %v136 = vsel %vm86, %v30, 0
  %v139 = vsel %vm86, %v31, 0
  %v142 = vsel %vm86, %v32, 0
  %v145 = vsel %vm86, %v33, 0
  %v148 = vsel %vm86, %v34, 0
  %v151 = vsel %vm86, %v35, 0
  %v154 = vsel %vm86, %v36, 0
  %v157 = vsel %vm86, %v37, 0
  %v160 = vsel %vm86, %v38, 0
  %v163 = vsel %vm86, %v39, 0
  %v166 = vsel %vm86, %v40, 0
  %v169 = vsel %vm86, %v41, 0
  %v172 = vsel %vm86, %v42, 0
  %v175 = vsel %vm86, %v43, 0
  %v178 = vsel %vm86, %v44, 0
  %v181 = vsel %vm86, %v45, 0
  %v184 = vsel %vm86, %v46, 0
  %v187 = vsel %vm86, %v47, 0
  %v190 = vsel %vm86, %v48, 0
  %v193 = vsel %vm86, %v49, 0
  %v196 = vsel %vm86, %v50, 0
  %v199 = vsel %vm86, %v51, 0
  %v202 = vsel %vm86, %v52, 0
  %v205 = vsel %vm86, %v53, 0
  %v208 = vsel %vm86, %v54, 0
  %v211 = vsel %vm86, %v55, 0
  %v214 = vsel %vm86, %v56, 0
  %v217 = vsel %vm86, %v57, 0
  %v220 = vsel %vm86, %v58, 0
  %v223 = vsel %vm86, %v59, 0
  %v226 = vsel %vm86, %v60, 0
  %v229 = vsel %vm86, %v61, 0
  %v232 = vsel %vm86, %v62, 0
  %v235 = vsel %vm86, %v63, 0
  %v238 = vsel %vm86, %v64, 0
  %v241 = vsel %vm86, %v65, 0
  %v244 = vsel %vm86, %v66, 0
  %v247 = vsel %vm86, %v67, 0
  %v250 = vsel %vm86, %v68, 0
  %v253 = vsel %vm86, %v69, 0
  %v256 = vsel %vm86, %v70, 0
  %v259 = vsel %vm86, %v71, 0
  %v262 = vsel %vm86, %v72, 0
  %v265 = vsel %vm86, %v73, 0
  %v268 = vsel %vm86, %v74, 0
  %v271 = vsel %vm86, %v75, 0
  %v274 = vsel %vm86, %v76, 0
  %v277 = vsel %vm86, %v77, 0
  %vm279 = vcmask 1042432
  %v281 = vsel %vm279, %v81, 0
  %283 = vmatpush.msra.mxu0 0.0
  %284 = vmatpush.msra.mxu0 0.0
  %285 = vmatpush.msra.mxu0 0.0
  %286 = vmatpush.msra.mxu0 0.0
  %287 = vmatpush.msra.mxu0 0.0
  %288 = vmatpush.msra.mxu0 0.0
  %289 = vmatpush.msra.mxu0 0.0
  %290 = vmatpush.msra.mxu0 0.0
  %291 = vmatpush.msra.mxu0 0.0
  %292 = vmatpush.msra.mxu0 0.0
  %293 = vmatpush.msra.mxu0 0.0
  %294 = vmatpush.msra.mxu0 0.0
  %295 = vmatpush.msra.mxu0 %v281
  %296 = vmatpush.msra.mxu0 %v80
  %297 = vmatpush.msra.mxu0 %v79
  %298 = vmatpush.msra.mxu0 %v78
  %299 = vmatmul.f32.gmra.mxu0 %v88
  %v300 = vpop.f32.mrf.mxu0
  %v301 = vadd.f32 %v84, %v300
  %302 = vmatmul.f32.gmra.mxu0 %v91
  %v303 = vpop.f32.mrf.mxu0
  %v304 = vadd.f32 %v84, %v303
  %305 = vmatmul.f32.gmra.mxu0 %v94
  %v306 = vpop.f32.mrf.mxu0
  %v307 = vadd.f32 %v84, %v306
  %308 = vmatmul.f32.gmra.mxu0 %v97
  %v309 = vpop.f32.mrf.mxu0
  %v310 = vadd.f32 %v84, %v309
  %311 = vmatmul.f32.gmra.mxu0 %v100
  %v312 = vpop.f32.mrf.mxu0
  %v313 = vadd.f32 %v84, %v312
  %314 = vmatmul.f32.gmra.mxu0 %v103
  %v315 = vpop.f32.mrf.mxu0
  %v316 = vadd.f32 %v84, %v315
  %317 = vmatmul.f32.gmra.mxu0 %v106
  %v318 = vpop.f32.mrf.mxu0
  %v319 = vadd.f32 %v84, %v318
  %320 = vmatmul.f32.gmra.mxu0 %v109
  %v321 = vpop.f32.mrf.mxu0
  %v322 = vadd.f32 %v84, %v321
  %323 = vmatmul.f32.gmra.mxu0 %v112
  %v324 = vpop.f32.mrf.mxu0
  %v325 = vadd.f32 %v84, %v324
  %326 = vmatmul.f32.gmra.mxu0 %v115
  %v327 = vpop.f32.mrf.mxu0
  %v328 = vadd.f32 %v84, %v327
  %329 = vmatmul.f32.gmra.mxu0 %v118
  %v330 = vpop.f32.mrf.mxu0
  %v331 = vadd.f32 %v84, %v330
  %332 = vmatmul.f32.gmra.mxu0 %v121
  %v333 = vpop.f32.mrf.mxu0
  %v334 = vadd.f32 %v84, %v333
  %335 = vmatmul.f32.gmra.mxu0 %v124
  %v336 = vpop.f32.mrf.mxu0
  %v337 = vadd.f32 %v84, %v336
  %338 = vmatmul.f32.gmra.mxu0 %v127
  %v339 = vpop.f32.mrf.mxu0
  %v340 = vadd.f32 %v84, %v339
  %341 = vmatmul.f32.gmra.mxu0 %v130
  %v342 = vpop.f32.mrf.mxu0
  %v343 = vadd.f32 %v84, %v342
  %344 = vmatmul.f32.gmra.mxu0 %v133
  %v345 = vpop.f32.mrf.mxu0
  %v346 = vadd.f32 %v84, %v345
  %347 = vmatmul.f32.gmra.mxu0 %v136
  %v348 = vpop.f32.mrf.mxu0
  %v349 = vadd.f32 %v84, %v348
  %350 = vmatmul.f32.gmra.mxu0 %v139
  %v351 = vpop.f32.mrf.mxu0
  %v352 = vadd.f32 %v84, %v351
  %353 = vmatmul.f32.gmra.mxu0 %v142
  %v354 = vpop.f32.mrf.mxu0
  %v355 = vadd.f32 %v84, %v354
  %356 = vmatmul.f32.gmra.mxu0 %v145
  %v357 = vpop.f32.mrf.mxu0
  %v358 = vadd.f32 %v84, %v357
  %359 = vmatmul.f32.gmra.mxu0 %v148
  %v360 = vpop.f32.mrf.mxu0
  %v361 = vadd.f32 %v84, %v360
  %362 = vmatmul.f32.gmra.mxu0 %v151
  %v363 = vpop.f32.mrf.mxu0
  %v364 = vadd.f32 %v84, %v363
  %365 = vmatmul.f32.gmra.mxu0 %v154
  %v366 = vpop.f32.mrf.mxu0
  %v367 = vadd.f32 %v84, %v366
  %368 = vmatmul.f32.gmra.mxu0 %v157
  %v369 = vpop.f32.mrf.mxu0
  %v370 = vadd.f32 %v84, %v369
  %371 = vmatmul.f32.gmra.mxu0 %v160
  %v372 = vpop.f32.mrf.mxu0
  %v373 = vadd.f32 %v84, %v372
  %374 = vmatmul.f32.gmra.mxu0 %v163
  %v375 = vpop.f32.mrf.mxu0
  %v376 = vadd.f32 %v84, %v375
  %377 = vmatmul.f32.gmra.mxu0 %v166
  %v378 = vpop.f32.mrf.mxu0
  %v379 = vadd.f32 %v84, %v378
  %380 = vmatmul.f32.gmra.mxu0 %v169
  %v381 = vpop.f32.mrf.mxu0
  %v382 = vadd.f32 %v84, %v381
  %383 = vmatmul.f32.gmra.mxu0 %v172
  %v384 = vpop.f32.mrf.mxu0
  %v385 = vadd.f32 %v84, %v384
  %386 = vmatmul.f32.gmra.mxu0 %v175
  %v387 = vpop.f32.mrf.mxu0
  %v388 = vadd.f32 %v84, %v387
  %389 = vmatmul.f32.gmra.mxu0 %v178
  %v390 = vpop.f32.mrf.mxu0
  %v391 = vadd.f32 %v84, %v390
  %392 = vmatmul.f32.gmra.mxu0 %v181
  %v393 = vpop.f32.mrf.mxu0
  %v394 = vadd.f32 %v84, %v393
  %395 = vmatmul.f32.gmra.mxu0 %v184
  %v396 = vpop.f32.mrf.mxu0
  %v397 = vadd.f32 %v84, %v396
  %398 = vmatmul.f32.gmra.mxu0 %v187
  %v399 = vpop.f32.mrf.mxu0
  %v400 = vadd.f32 %v84, %v399
  %401 = vmatmul.f32.gmra.mxu0 %v190
  %v402 = vpop.f32.mrf.mxu0
  %v403 = vadd.f32 %v84, %v402
  %404 = vmatmul.f32.gmra.mxu0 %v193
  %v405 = vpop.f32.mrf.mxu0
  %v406 = vadd.f32 %v84, %v405
  %407 = vmatmul.f32.gmra.mxu0 %v196
  %v408 = vpop.f32.mrf.mxu0
  %v409 = vadd.f32 %v84, %v408
  %410 = vmatmul.f32.gmra.mxu0 %v199
  %v411 = vpop.f32.mrf.mxu0
  %v412 = vadd.f32 %v84, %v411
  %413 = vmatmul.f32.gmra.mxu0 %v202
  %v414 = vpop.f32.mrf.mxu0
  %v415 = vadd.f32 %v84, %v414
  %416 = vmatmul.f32.gmra.mxu0 %v205
  %v417 = vpop.f32.mrf.mxu0
  %v418 = vadd.f32 %v84, %v417
  %419 = vmatmul.f32.gmra.mxu0 %v208
  %v420 = vpop.f32.mrf.mxu0
  %v421 = vadd.f32 %v84, %v420
  %422 = vmatmul.f32.gmra.mxu0 %v211
  %v423 = vpop.f32.mrf.mxu0
  %v424 = vadd.f32 %v84, %v423
  %425 = vmatmul.f32.gmra.mxu0 %v214
  %v426 = vpop.f32.mrf.mxu0
  %v427 = vadd.f32 %v84, %v426
  %428 = vmatmul.f32.gmra.mxu0 %v217
  %v429 = vpop.f32.mrf.mxu0
  %v430 = vadd.f32 %v84, %v429
  %431 = vmatmul.f32.gmra.mxu0 %v220
  %v432 = vpop.f32.mrf.mxu0
  %v433 = vadd.f32 %v84, %v432
  %434 = vmatmul.f32.gmra.mxu0 %v223
  %v435 = vpop.f32.mrf.mxu0
  %v436 = vadd.f32 %v84, %v435
  %437 = vmatmul.f32.gmra.mxu0 %v226
  %v438 = vpop.f32.mrf.mxu0
  %v439 = vadd.f32 %v84, %v438
  %440 = vmatmul.f32.gmra.mxu0 %v229
  %v441 = vpop.f32.mrf.mxu0
  %v442 = vadd.f32 %v84, %v441
  %443 = vmatmul.f32.gmra.mxu0 %v232
  %v444 = vpop.f32.mrf.mxu0
  %v445 = vadd.f32 %v84, %v444
  %446 = vmatmul.f32.gmra.mxu0 %v235
  %v447 = vpop.f32.mrf.mxu0
  %v448 = vadd.f32 %v84, %v447
  %449 = vmatmul.f32.gmra.mxu0 %v238
  %v450 = vpop.f32.mrf.mxu0
  %v451 = vadd.f32 %v84, %v450
  %452 = vmatmul.f32.gmra.mxu0 %v241
  %v453 = vpop.f32.mrf.mxu0
  %v454 = vadd.f32 %v84, %v453
  %455 = vmatmul.f32.gmra.mxu0 %v244
  %v456 = vpop.f32.mrf.mxu0
  %v457 = vadd.f32 %v84, %v456
  %458 = vmatmul.f32.gmra.mxu0 %v247
  %v459 = vpop.f32.mrf.mxu0
  %v460 = vadd.f32 %v84, %v459
  %461 = vmatmul.f32.gmra.mxu0 %v250
  %v462 = vpop.f32.mrf.mxu0
  %v463 = vadd.f32 %v84, %v462
  %464 = vmatmul.f32.gmra.mxu0 %v253
  %v465 = vpop.f32.mrf.mxu0
  %v466 = vadd.f32 %v84, %v465
  %467 = vmatmul.f32.gmra.mxu0 %v256
  %v468 = vpop.f32.mrf.mxu0
  %v469 = vadd.f32 %v84, %v468
  %470 = vmatmul.f32.gmra.mxu0 %v259
  %v471 = vpop.f32.mrf.mxu0
  %v472 = vadd.f32 %v84, %v471
  %473 = vmatmul.f32.gmra.mxu0 %v262
  %v474 = vpop.f32.mrf.mxu0
  %v475 = vadd.f32 %v84, %v474
  %476 = vmatmul.f32.gmra.mxu0 %v265
  %v477 = vpop.f32.mrf.mxu0
  %v478 = vadd.f32 %v84, %v477
  %479 = vmatmul.f32.gmra.mxu0 %v268
  %v480 = vpop.f32.mrf.mxu0
  %v481 = vadd.f32 %v84, %v480
  %482 = vmatmul.f32.gmra.mxu0 %v271
  %v483 = vpop.f32.mrf.mxu0
  %v484 = vadd.f32 %v84, %v483
  %485 = vmatmul.f32.gmra.mxu0 %v274
  %v486 = vpop.f32.mrf.mxu0
  %v487 = vadd.f32 %v84, %v486
  %488 = vmatmul.f32.gmra.mxu0 %v277
  %v489 = vpop.f32.mrf.mxu0
  %v490 = vadd.f32 %v84, %v489
  %491 = vdwg.mxu0
  %v492 = vmax.f32 %v301, 0.0
  %v493 = vmax.f32 %v304, 0.0
  %v494 = vmax.f32 %v307, 0.0
  %v495 = vmax.f32 %v310, 0.0
  %v496 = vmax.f32 %v313, 0.0
  %v497 = vmax.f32 %v316, 0.0
  %v498 = vmax.f32 %v319, 0.0
  %v499 = vmax.f32 %v322, 0.0
  %v500 = vmax.f32 %v325, 0.0
  %v501 = vmax.f32 %v328, 0.0
  %v502 = vmax.f32 %v331, 0.0
  %v503 = vmax.f32 %v334, 0.0
  %v504 = vmax.f32 %v337, 0.0
  %v505 = vmax.f32 %v340, 0.0
  %v506 = vmax.f32 %v343, 0.0
  %v507 = vmax.f32 %v346, 0.0
  %v508 = vmax.f32 %v349, 0.0
  %v509 = vmax.f32 %v352, 0.0
  %v510 = vmax.f32 %v355, 0.0
  %v511 = vmax.f32 %v358, 0.0
  %v512 = vmax.f32 %v361, 0.0
  %v513 = vmax.f32 %v364, 0.0
  %v514 = vmax.f32 %v367, 0.0
  %v515 = vmax.f32 %v370, 0.0
  %v516 = vmax.f32 %v373, 0.0
  %v517 = vmax.f32 %v376, 0.0
  %v518 = vmax.f32 %v379, 0.0
  %v519 = vmax.f32 %v382, 0.0
  %v520 = vmax.f32 %v385, 0.0
  %v521 = vmax.f32 %v388, 0.0
  %v522 = vmax.f32 %v391, 0.0
  %v523 = vmax.f32 %v394, 0.0
  %v524 = vmax.f32 %v397, 0.0
  %v525 = vmax.f32 %v400, 0.0
  %v526 = vmax.f32 %v403, 0.0
  %v527 = vmax.f32 %v406, 0.0
  %v528 = vmax.f32 %v409, 0.0
  %v529 = vmax.f32 %v412, 0.0
  %v530 = vmax.f32 %v415, 0.0
  %v531 = vmax.f32 %v418, 0.0
  %v532 = vmax.f32 %v421, 0.0
  %v533 = vmax.f32 %v424, 0.0
  %v534 = vmax.f32 %v427, 0.0
  %v535 = vmax.f32 %v430, 0.0
  %v536 = vmax.f32 %v433, 0.0
  %v537 = vmax.f32 %v436, 0.0
  %v538 = vmax.f32 %v439, 0.0
  %v539 = vmax.f32 %v442, 0.0
  %v540 = vmax.f32 %v445, 0.0
  %v541 = vmax.f32 %v448, 0.0
  %v542 = vmax.f32 %v451, 0.0
  %v543 = vmax.f32 %v454, 0.0
  %v544 = vmax.f32 %v457, 0.0
  %v545 = vmax.f32 %v460, 0.0
  %v546 = vmax.f32 %v463, 0.0
  %v547 = vmax.f32 %v466, 0.0
  %v548 = vmax.f32 %v469, 0.0
  %v549 = vmax.f32 %v472, 0.0
  %v550 = vmax.f32 %v475, 0.0
  %v551 = vmax.f32 %v478, 0.0
  %v552 = vmax.f32 %v481, 0.0
  %v553 = vmax.f32 %v484, 0.0
  %v554 = vmax.f32 %v487, 0.0
  %v555 = vmax.f32 %v490, 0.0
  %v556 = vmax.f32 %v492, %v508
  %v557 = vmax.f32 %v493, %v509
  %v558 = vmax.f32 %v494, %v510
  %v559 = vmax.f32 %v495, %v511
  %v560 = vmax.f32 %v496, %v512
  %v561 = vmax.f32 %v497, %v513
  %v562 = vmax.f32 %v498, %v514
  %v563 = vmax.f32 %v499, %v515
  %v564 = vmax.f32 %v500, %v516
  %v565 = vmax.f32 %v501, %v517
  %v566 = vmax.f32 %v502, %v518
  %v567 = vmax.f32 %v503, %v519
  %v568 = vmax.f32 %v504, %v520
  %v569 = vmax.f32 %v505, %v521
  %v570 = vmax.f32 %v506, %v522
  %v571 = vmax.f32 %v507, %v523
  %v572 = vmax.f32 %v524, %v540
  %v573 = vmax.f32 %v525, %v541
  %v574 = vmax.f32 %v526, %v542
  %v575 = vmax.f32 %v527, %v543
  %v576 = vmax.f32 %v528, %v544
  %v577 = vmax.f32 %v529, %v545
  %v578 = vmax.f32 %v530, %v546
  %v579 = vmax.f32 %v531, %v547
  %v580 = vmax.f32 %v532, %v548
  %v581 = vmax.f32 %v533, %v549
  %v582 = vmax.f32 %v534, %v550
  %v583 = vmax.f32 %v535, %v551
  %v584 = vmax.f32 %v536, %v552
  %v585 = vmax.f32 %v537, %v553
  %v586 = vmax.f32 %v538, %v554
  %v587 = vmax.f32 %v539, %v555
  %v588 = vmax.f32 %v556, %v572
  %v589 = vmax.f32 %v557, %v573
  %v590 = vmax.f32 %v558, %v574
  %v591 = vmax.f32 %v559, %v575
  %v592 = vmax.f32 %v560, %v576
  %v593 = vmax.f32 %v561, %v577
  %v594 = vmax.f32 %v562, %v578
  %v595 = vmax.f32 %v563, %v579
  %v596 = vmax.f32 %v564, %v580
  %v597 = vmax.f32 %v565, %v581
  %v598 = vmax.f32 %v566, %v582
  %v599 = vmax.f32 %v567, %v583
  %v600 = vmax.f32 %v568, %v584
  %v601 = vmax.f32 %v569, %v585
  %v602 = vmax.f32 %v570, %v586
  %v603 = vmax.f32 %v571, %v587
  %vm604 = vcmask 261120
  %605 = vst.msk [vmem:[%s3] sm:$0xff] %vm604, %v588
  %606 = vst.msk [vmem:[%s3 + $0x8] sm:$0xff] %vm604, %v589
  %607 = vst.msk [vmem:[%s3 + $0x10] sm:$0xff] %vm604, %v590
  %608 = vst.msk [vmem:[%s3 + $0x18] sm:$0xff] %vm604, %v591
  %609 = vst.msk [vmem:[%s3 + $0x20] sm:$0xff] %vm604, %v592
  %610 = vst.msk [vmem:[%s3 + $0x28] sm:$0xff] %vm604, %v593
  %611 = vst.msk [vmem:[%s3 + $0x30] sm:$0xff] %vm604, %v594
  %612 = vst.msk [vmem:[%s3 + $0x38] sm:$0xff] %vm604, %v595
  %613 = vst.msk [vmem:[%s3 + $0x40] sm:$0xff] %vm604, %v596
  %614 = vst.msk [vmem:[%s3 + $0x48] sm:$0xff] %vm604, %v597
  %615 = vst.msk [vmem:[%s3 + $0x50] sm:$0xff] %vm604, %v598
  %616 = vst.msk [vmem:[%s3 + $0x58] sm:$0xff] %vm604, %v599
  %617 = vst.msk [vmem:[%s3 + $0x60] sm:$0xff] %vm604, %v600
  %618 = vst.msk [vmem:[%s3 + $0x68] sm:$0xff] %vm604, %v601
  %619 = vst.msk [vmem:[%s3 + $0x70] sm:$0xff] %vm604, %v602
  %620 = vst.msk [vmem:[%s3 + $0x78] sm:$0xff] %vm604, %v603
  // Predicated region
  $region14: #{neural_network_forward.3} parent=0 // pred_check
    _
  $region15: #{neural_network_forward.3} parent=0 // pred_check_branch
    %622 = sbr.rel (0) target = $region17
  $region16: #{neural_network_forward.3} parent=0 // pred_region
    _
  $region17: #{neural_network_forward.3} parent=0 // pred_fallthru
    _
  // Predicated region
  $region18: #{neural_network_forward.3} parent=0 // pred_check
    _
  $region19: #{neural_network_forward.3} parent=0 // pred_check_branch
    %624 = sbr.rel (0) target = $region21
  $region20: #{neural_network_forward.3} parent=0 // pred_region
    _
  $region21: #{neural_network_forward.3} parent=0 // pred_fallthru
    _

// kernel: neural_network_forward.4
$region0: #{neural_network_forward.4}
  #allocation0 [shape = 'u32[]', space=smem, size = 0x4, offset = 0x4, fixed_abs, tag = 'smem constant byte address 0x4 - core index']
  #allocation1 [shape = 'u32[72,128]{1,0:T(1,128)}', space=vmem, size = 0x9000, scoped, tag = 'internal scratch']
  %s0 = inlined_call_operand.vmem [shape: f32[128,288], index: 0, kind: input, shape index: {}]
  %s1 = inlined_call_operand.vmem [shape: f32[288,32], index: 1, kind: input, shape index: {}]
  %s2 = inlined_call_operand.vmem [shape: f32[1,32], index: 2, kind: input, shape index: {}]
  %s3 = inlined_call_operand.vmem [shape: f32[32,32], index: 3, kind: output, shape index: {}]
  %s4 = sld [smem:[#allocation0]]
  $region22: #{neural_network_forward.4} parent=0
    _
  %s6 = ssub.s32 1, %s4
  %s7 = scalar_select 0, %s6, %s4
  // Predicated region
  $region2: #{neural_network_forward.4} parent=0 // pred_check
    _
  $region3: #{neural_network_forward.4} parent=0 // pred_check_branch
    %9 = sbr.rel (0) target = $region5
  $region4: #{neural_network_forward.4} parent=0 // pred_region
    _
  $region5: #{neural_network_forward.4} parent=0 // pred_fallthru
    _
  // Predicated region
  $region6: #{neural_network_forward.4} parent=0 // pred_check
    _
  $region7: #{neural_network_forward.4} parent=0 // pred_check_branch
    %11 = sbr.rel (0) target = $region9
  $region8: #{neural_network_forward.4} parent=0 // pred_region
    _
  $region9: #{neural_network_forward.4} parent=0 // pred_fallthru
    _
  // Predicated region
  $region10: #{neural_network_forward.4} parent=0 // pred_check
    _
  $region11: #{neural_network_forward.4} parent=0 // pred_check_branch
    %13 = sbr.rel (0) target = $region13
  $region12: #{neural_network_forward.4} parent=0 // pred_region
    _
  $region13: #{neural_network_forward.4} parent=0 // pred_fallthru
    _
  %v14 = vld [vmem:[%s0] sm:$0xff]
  %v15 = vld [vmem:[%s0 + $0x8] sm:$0xff]
  %v16 = vld [vmem:[%s0 + $0x10] sm:$0xff]
  %v17 = vld [vmem:[%s0 + $0x18] sm:$0xff]
  %v18 = vld [vmem:[%s0 + $0x20] sm:$0xff]
  %v19 = vld [vmem:[%s0 + $0x28] sm:$0xff]
  %v20 = vld [vmem:[%s0 + $0x30] sm:$0xff]
  %v21 = vld [vmem:[%s0 + $0x38] sm:$0xff]
  %v22 = vld [vmem:[%s0 + $0x40] sm:$0xff]
  %v23 = vld [vmem:[%s0 + $0x48] sm:$0xff]
  %v24 = vld [vmem:[%s0 + $0x50] sm:$0xff]
  %v25 = vld [vmem:[%s0 + $0x58] sm:$0xff]
  %v26 = vld [vmem:[%s0 + $0x60] sm:$0xff]
  %v27 = vld [vmem:[%s0 + $0x68] sm:$0xff]
  %v28 = vld [vmem:[%s0 + $0x70] sm:$0xff]
  %v29 = vld [vmem:[%s0 + $0x78] sm:$0xff]
  %v30 = vld [vmem:[%s0 + $0x80] sm:$0xff]
  %v31 = vld [vmem:[%s0 + $0x88] sm:$0xff]
  %v32 = vld [vmem:[%s0 + $0x90] sm:$0xff]
  %v33 = vld [vmem:[%s0 + $0x98] sm:$0xff]
  %v34 = vld [vmem:[%s0 + $0xa0] sm:$0xff]
  %v35 = vld [vmem:[%s0 + $0xa8] sm:$0xff]
  %v36 = vld [vmem:[%s0 + $0xb0] sm:$0xff]
  %v37 = vld [vmem:[%s0 + $0xb8] sm:$0xff]
  %v38 = vld [vmem:[%s0 + $0xc0] sm:$0xff]
  %v39 = vld [vmem:[%s0 + $0xc8] sm:$0xff]
  %v40 = vld [vmem:[%s0 + $0xd0] sm:$0xff]
  %v41 = vld [vmem:[%s0 + $0xd8] sm:$0xff]
  %v42 = vld [vmem:[%s0 + $0xe0] sm:$0xff]
  %v43 = vld [vmem:[%s0 + $0xe8] sm:$0xff]
  %v44 = vld [vmem:[%s0 + $0xf0] sm:$0xff]
  %v45 = vld [vmem:[%s0 + $0xf8] sm:$0xff]
  %v46 = vld [vmem:[%s0 + $0x100] sm:$0xff]
  %v47 = vld [vmem:[%s0 + $0x108] sm:$0xff]
  %v48 = vld [vmem:[%s0 + $0x110] sm:$0xff]
  %v49 = vld [vmem:[%s0 + $0x118] sm:$0xff]
  %v50 = vld [vmem:[%s0 + $0x120] sm:$0xff]
  %v51 = vld [vmem:[%s0 + $0x128] sm:$0xff]
  %v52 = vld [vmem:[%s0 + $0x130] sm:$0xff]
  %v53 = vld [vmem:[%s0 + $0x138] sm:$0xff]
  %v54 = vld [vmem:[%s0 + $0x140] sm:$0xff]
  %v55 = vld [vmem:[%s0 + $0x148] sm:$0xff]
  %v56 = vld [vmem:[%s0 + $0x150] sm:$0xff]
  %v57 = vld [vmem:[%s0 + $0x158] sm:$0xff]
  %v58 = vld [vmem:[%s0 + $0x160] sm:$0xff]
  %v59 = vld [vmem:[%s0 + $0x168] sm:$0xff]
  %v60 = vld [vmem:[%s0 + $0x170] sm:$0xff]
  %v61 = vld [vmem:[%s0 + $0x178] sm:$0xff]
  %v62 = vld [vmem:[%s1] sm:$0xff]
  %v63 = vld [vmem:[%s1 + $0x8] sm:$0xff]
  %v64 = vld [vmem:[%s1 + $0x10] sm:$0xff]
  %v65 = vld [vmem:[%s1 + $0x18] sm:$0xff]
  %v66 = vld [vmem:[%s1 + $0x20] sm:$0xff]
  %v67 = vld [vmem:[%s1 + $0x28] sm:$0xff]
  %v68 = vld [vmem:[%s1 + $0x30] sm:$0xff]
  %v69 = vld [vmem:[%s1 + $0x38] sm:$0xff]
  %v70 = vld [vmem:[%s1 + $0x40] sm:$0xff]
  %v71 = vld [vmem:[%s1 + $0x48] sm:$0xff]
  %v72 = vld [vmem:[%s1 + $0x50] sm:$0xff]
  %v73 = vld [vmem:[%s1 + $0x58] sm:$0xff]
  %v74 = vld [vmem:[%s1 + $0x60] sm:$0xff]
  %v75 = vld [vmem:[%s1 + $0x68] sm:$0xff]
  %v76 = vld [vmem:[%s1 + $0x70] sm:$0xff]
  %v77 = vld [vmem:[%s1 + $0x78] sm:$0xff]
  %v78 = vld [vmem:[%s1 + $0x80] sm:$0xff]
  %v79 = vld [vmem:[%s1 + $0x88] sm:$0xff]
  %v80 = vld [vmem:[%s1 + $0x90] sm:$0xff]
  %v81 = vld [vmem:[%s1 + $0x98] sm:$0xff]
  %v82 = vld [vmem:[%s1 + $0xa0] sm:$0xff]
  %v83 = vld [vmem:[%s1 + $0xa8] sm:$0xff]
  %v84 = vld [vmem:[%s1 + $0xb0] sm:$0xff]
  %v85 = vld [vmem:[%s1 + $0xb8] sm:$0xff]
  %v86 = vld [vmem:[%s1 + $0xc0] sm:$0xff]
  %v87 = vld [vmem:[%s1 + $0xc8] sm:$0xff]
  %v88 = vld [vmem:[%s1 + $0xd0] sm:$0xff]
  %v89 = vld [vmem:[%s1 + $0xd8] sm:$0xff]
  %v90 = vld [vmem:[%s1 + $0xe0] sm:$0xff]
  %v91 = vld [vmem:[%s1 + $0xe8] sm:$0xff]
  %v92 = vld [vmem:[%s1 + $0xf0] sm:$0xff]
  %v93 = vld [vmem:[%s1 + $0xf8] sm:$0xff]
  %v94 = vld [vmem:[%s1 + $0x100] sm:$0xff]
  %v95 = vld [vmem:[%s1 + $0x108] sm:$0xff]
  %v96 = vld [vmem:[%s1 + $0x110] sm:$0xff]
  %v97 = vld [vmem:[%s1 + $0x118] sm:$0xff]
  %v98 = vld [vmem:[%s2] sm:$0x1]
  %v100 = vperm.slane %v98, 0
  %vm102 = vcmask 261120
  %v104 = vsel %vm102, %v16, 0
  %v107 = vsel %vm102, %v19, 0
  %v110 = vsel %vm102, %v22, 0
  %v113 = vsel %vm102, %v25, 0
  %v116 = vsel %vm102, %v28, 0
  %v119 = vsel %vm102, %v31, 0
  %v122 = vsel %vm102, %v34, 0
  %v125 = vsel %vm102, %v37, 0
  %v128 = vsel %vm102, %v40, 0
  %v131 = vsel %vm102, %v43, 0
  %v134 = vsel %vm102, %v46, 0
  %v137 = vsel %vm102, %v49, 0
  %v140 = vsel %vm102, %v52, 0
  %v143 = vsel %vm102, %v55, 0
  %v146 = vsel %vm102, %v58, 0
  %v149 = vsel %vm102, %v61, 0
  %151 = vmatpush.msra.mxu0 %v77
  %152 = vmatpush.msra.mxu0 %v76
  %153 = vmatpush.msra.mxu0 %v75
  %154 = vmatpush.msra.mxu0 %v74
  %155 = vmatpush.msra.mxu0 %v73
  %156 = vmatpush.msra.mxu0 %v72
  %157 = vmatpush.msra.mxu0 %v71
  %158 = vmatpush.msra.mxu0 %v70
  %159 = vmatpush.msra.mxu0 %v69
  %160 = vmatpush.msra.mxu0 %v68
  %161 = vmatpush.msra.mxu0 %v67
  %162 = vmatpush.msra.mxu0 %v66
  %163 = vmatpush.msra.mxu0 %v65
  %164 = vmatpush.msra.mxu0 %v64
  %165 = vmatpush.msra.mxu0 %v63
  %166 = vmatpush.msra.mxu0 %v62
  %167 = vmatmul.f32.gmra.mxu0 %v14
  %v168 = vpop.f32.mrf.mxu0
  %v169 = vadd.f32 %v100, %v168
  %170 = vmatmul.f32.gmra.mxu0 %v17
  %v171 = vpop.f32.mrf.mxu0
  %v172 = vadd.f32 %v100, %v171
  %173 = vmatmul.f32.gmra.mxu0 %v20
  %v174 = vpop.f32.mrf.mxu0
  %v175 = vadd.f32 %v100, %v174
  %176 = vmatmul.f32.gmra.mxu0 %v23
  %v177 = vpop.f32.mrf.mxu0
  %v178 = vadd.f32 %v100, %v177
  %179 = vmatmul.f32.gmra.mxu0 %v26
  %v180 = vpop.f32.mrf.mxu0
  %v181 = vadd.f32 %v100, %v180
  %182 = vmatmul.f32.gmra.mxu0 %v29
  %v183 = vpop.f32.mrf.mxu0
  %v184 = vadd.f32 %v100, %v183
  %185 = vmatmul.f32.gmra.mxu0 %v32
  %v186 = vpop.f32.mrf.mxu0
  %v187 = vadd.f32 %v100, %v186
  %188 = vmatmul.f32.gmra.mxu0 %v35
  %v189 = vpop.f32.mrf.mxu0
  %v190 = vadd.f32 %v100, %v189
  %191 = vmatmul.f32.gmra.mxu0 %v38
  %v192 = vpop.f32.mrf.mxu0
  %v193 = vadd.f32 %v100, %v192
  %194 = vmatmul.f32.gmra.mxu0 %v41
  %v195 = vpop.f32.mrf.mxu0
  %v196 = vadd.f32 %v100, %v195
  %197 = vmatmul.f32.gmra.mxu0 %v44
  %v198 = vpop.f32.mrf.mxu0
  %v199 = vadd.f32 %v100, %v198
  %200 = vmatmul.f32.gmra.mxu0 %v47
  %v201 = vpop.f32.mrf.mxu0
  %v202 = vadd.f32 %v100, %v201
  %203 = vmatmul.f32.gmra.mxu0 %v50
  %v204 = vpop.f32.mrf.mxu0
  %v205 = vadd.f32 %v100, %v204
  %206 = vmatmul.f32.gmra.mxu0 %v53
  %v207 = vpop.f32.mrf.mxu0
  %v208 = vadd.f32 %v100, %v207
  %209 = vmatmul.f32.gmra.mxu0 %v56
  %v210 = vpop.f32.mrf.mxu0
  %v211 = vadd.f32 %v100, %v210
  %212 = vmatmul.f32.gmra.mxu0 %v59
  %v213 = vpop.f32.mrf.mxu0
  %v214 = vadd.f32 %v100, %v213
  %215 = vdwg.mxu0
  %216 = vmatpush.msra.mxu0 %v93
  %217 = vmatpush.msra.mxu0 %v92
  %218 = vmatpush.msra.mxu0 %v91
  %219 = vmatpush.msra.mxu0 %v90
  %220 = vmatpush.msra.mxu0 %v89
  %221 = vmatpush.msra.mxu0 %v88
  %222 = vmatpush.msra.mxu0 %v87
  %223 = vmatpush.msra.mxu0 %v86
  %224 = vmatpush.msra.mxu0 %v85
  %225 = vmatpush.msra.mxu0 %v84
  %226 = vmatpush.msra.mxu0 %v83
  %227 = vmatpush.msra.mxu0 %v82
  %228 = vmatpush.msra.mxu0 %v81
  %229 = vmatpush.msra.mxu0 %v80
  %230 = vmatpush.msra.mxu0 %v79
  %231 = vmatpush.msra.mxu0 %v78
  %232 = vmatmul.f32.gmra.mxu0 %v15
  %v233 = vpop.f32.mrf.mxu0
  %v234 = vadd.f32 %v169, %v233
  %235 = vmatmul.f32.gmra.mxu0 %v18
  %v236 = vpop.f32.mrf.mxu0
  %v237 = vadd.f32 %v172, %v236
  %238 = vmatmul.f32.gmra.mxu0 %v21
  %v239 = vpop.f32.mrf.mxu0
  %v240 = vadd.f32 %v175, %v239
  %241 = vmatmul.f32.gmra.mxu0 %v24
  %v242 = vpop.f32.mrf.mxu0
  %v243 = vadd.f32 %v178, %v242
  %244 = vmatmul.f32.gmra.mxu0 %v27
  %v245 = vpop.f32.mrf.mxu0
  %v246 = vadd.f32 %v181, %v245
  %247 = vmatmul.f32.gmra.mxu0 %v30
  %v248 = vpop.f32.mrf.mxu0
  %v249 = vadd.f32 %v184, %v248
  %250 = vmatmul.f32.gmra.mxu0 %v33
  %v251 = vpop.f32.mrf.mxu0
  %v252 = vadd.f32 %v187, %v251
  %253 = vmatmul.f32.gmra.mxu0 %v36
  %v254 = vpop.f32.mrf.mxu0
  %v255 = vadd.f32 %v190, %v254
  %256 = vmatmul.f32.gmra.mxu0 %v39
  %v257 = vpop.f32.mrf.mxu0
  %v258 = vadd.f32 %v193, %v257
  %259 = vmatmul.f32.gmra.mxu0 %v42
  %v260 = vpop.f32.mrf.mxu0
  %v261 = vadd.f32 %v196, %v260
  %262 = vmatmul.f32.gmra.mxu0 %v45
  %v263 = vpop.f32.mrf.mxu0
  %v264 = vadd.f32 %v199, %v263
  %265 = vmatmul.f32.gmra.mxu0 %v48
  %v266 = vpop.f32.mrf.mxu0
  %v267 = vadd.f32 %v202, %v266
  %268 = vmatmul.f32.gmra.mxu0 %v51
  %v269 = vpop.f32.mrf.mxu0
  %v270 = vadd.f32 %v205, %v269
  %271 = vmatmul.f32.gmra.mxu0 %v54
  %v272 = vpop.f32.mrf.mxu0
  %v273 = vadd.f32 %v208, %v272
  %274 = vmatmul.f32.gmra.mxu0 %v57
  %v275 = vpop.f32.mrf.mxu0
  %v276 = vadd.f32 %v211, %v275
  %277 = vmatmul.f32.gmra.mxu0 %v60
  %v278 = vpop.f32.mrf.mxu0
  %v279 = vadd.f32 %v214, %v278
  %280 = vdwg.mxu0
  %281 = vmatpush.msra.mxu0 0.0
  %282 = vmatpush.msra.mxu0 0.0
  %283 = vmatpush.msra.mxu0 0.0
  %284 = vmatpush.msra.mxu0 0.0
  %285 = vmatpush.msra.mxu0 0.0
  %286 = vmatpush.msra.mxu0 0.0
  %287 = vmatpush.msra.mxu0 0.0
  %288 = vmatpush.msra.mxu0 0.0
  %289 = vmatpush.msra.mxu0 0.0
  %290 = vmatpush.msra.mxu0 0.0
  %291 = vmatpush.msra.mxu0 0.0
  %292 = vmatpush.msra.mxu0 0.0
  %293 = vmatpush.msra.mxu0 %v97
  %294 = vmatpush.msra.mxu0 %v96
  %295 = vmatpush.msra.mxu0 %v95
  %296 = vmatpush.msra.mxu0 %v94
  %297 = vmatmul.f32.gmra.mxu0 %v104
  %v298 = vpop.f32.mrf.mxu0
  %v299 = vadd.f32 %v234, %v298
  %300 = vmatmul.f32.gmra.mxu0 %v107
  %v301 = vpop.f32.mrf.mxu0
  %v302 = vadd.f32 %v237, %v301
  %303 = vmatmul.f32.gmra.mxu0 %v110
  %v304 = vpop.f32.mrf.mxu0
  %v305 = vadd.f32 %v240, %v304
  %306 = vmatmul.f32.gmra.mxu0 %v113
  %v307 = vpop.f32.mrf.mxu0
  %v308 = vadd.f32 %v243, %v307
  %309 = vmatmul.f32.gmra.mxu0 %v116
  %v310 = vpop.f32.mrf.mxu0
  %v311 = vadd.f32 %v246, %v310
  %312 = vmatmul.f32.gmra.mxu0 %v119
  %v313 = vpop.f32.mrf.mxu0
  %v314 = vadd.f32 %v249, %v313
  %315 = vmatmul.f32.gmra.mxu0 %v122
  %v316 = vpop.f32.mrf.mxu0
  %v317 = vadd.f32 %v252, %v316
  %318 = vmatmul.f32.gmra.mxu0 %v125
  %v319 = vpop.f32.mrf.mxu0
  %v320 = vadd.f32 %v255, %v319
  %321 = vmatmul.f32.gmra.mxu0 %v128
  %v322 = vpop.f32.mrf.mxu0
  %v323 = vadd.f32 %v258, %v322
  %324 = vmatmul.f32.gmra.mxu0 %v131
  %v325 = vpop.f32.mrf.mxu0
  %v326 = vadd.f32 %v261, %v325
  %327 = vmatmul.f32.gmra.mxu0 %v134
  %v328 = vpop.f32.mrf.mxu0
  %v329 = vadd.f32 %v264, %v328
  %330 = vmatmul.f32.gmra.mxu0 %v137
  %v331 = vpop.f32.mrf.mxu0
  %v332 = vadd.f32 %v267, %v331
  %333 = vmatmul.f32.gmra.mxu0 %v140
  %v334 = vpop.f32.mrf.mxu0
  %v335 = vadd.f32 %v270, %v334
  %336 = vmatmul.f32.gmra.mxu0 %v143
  %v337 = vpop.f32.mrf.mxu0
  %v338 = vadd.f32 %v273, %v337
  %339 = vmatmul.f32.gmra.mxu0 %v146
  %v340 = vpop.f32.mrf.mxu0
  %v341 = vadd.f32 %v276, %v340
  %342 = vmatmul.f32.gmra.mxu0 %v149
  %v343 = vpop.f32.mrf.mxu0
  %v344 = vadd.f32 %v279, %v343
  %345 = vdwg.mxu0
  %v346 = vmax.f32 %v299, 0.0
  %v347 = vmax.f32 %v302, 0.0
  %v348 = vmax.f32 %v305, 0.0
  %v349 = vmax.f32 %v308, 0.0
  %v350 = vmax.f32 %v311, 0.0
  %v351 = vmax.f32 %v314, 0.0
  %v352 = vmax.f32 %v317, 0.0
  %v353 = vmax.f32 %v320, 0.0
  %v354 = vmax.f32 %v323, 0.0
  %v355 = vmax.f32 %v326, 0.0
  %v356 = vmax.f32 %v329, 0.0
  %v357 = vmax.f32 %v332, 0.0
  %v358 = vmax.f32 %v335, 0.0
  %v359 = vmax.f32 %v338, 0.0
  %v360 = vmax.f32 %v341, 0.0
  %v361 = vmax.f32 %v344, 0.0
  %v362 = vmax.f32 %v346, %v350
  %v363 = vmax.f32 %v347, %v351
  %v364 = vmax.f32 %v348, %v352
  %v365 = vmax.f32 %v349, %v353
  %v366 = vmax.f32 %v354, %v358
  %v367 = vmax.f32 %v355, %v359
  %v368 = vmax.f32 %v356, %v360
  %v369 = vmax.f32 %v357, %v361
  %v370 = vmax.f32 %v362, %v366
  %v371 = vmax.f32 %v363, %v367
  %v372 = vmax.f32 %v364, %v368
  %v373 = vmax.f32 %v365, %v369
  %374 = vst.msk [vmem:[%s3] sm:$0xff] %vm102, %v370
  %375 = vst.msk [vmem:[%s3 + $0x8] sm:$0xff] %vm102, %v371
  %376 = vst.msk [vmem:[%s3 + $0x10] sm:$0xff] %vm102, %v372
  %377 = vst.msk [vmem:[%s3 + $0x18] sm:$0xff] %vm102, %v373
  // Predicated region
  $region14: #{neural_network_forward.4} parent=0 // pred_check
    _
  $region15: #{neural_network_forward.4} parent=0 // pred_check_branch
    %379 = sbr.rel (0) target = $region17
  $region16: #{neural_network_forward.4} parent=0 // pred_region
    _
  $region17: #{neural_network_forward.4} parent=0 // pred_fallthru
    _
  // Predicated region
  $region18: #{neural_network_forward.4} parent=0 // pred_check
    _
  $region19: #{neural_network_forward.4} parent=0 // pred_check_branch
    %381 = sbr.rel (0) target = $region21
  $region20: #{neural_network_forward.4} parent=0 // pred_region
    _
  $region21: #{neural_network_forward.4} parent=0 // pred_fallthru
    _

// kernel: neural_network_forward.5
$region0: #{neural_network_forward.5}
  #allocation0 [shape = 'u32[]', space=smem, size = 0x4, offset = 0x4, fixed_abs, tag = 'smem constant byte address 0x4 - core index']
  #allocation1 [shape = 'u32[72,128]{1,0:T(1,128)}', space=vmem, size = 0x9000, scoped, tag = 'internal scratch']
  %s0 = inlined_call_operand.vmem [shape: f32[2,512], index: 0, kind: input, shape index: {}]
  %s1 = inlined_call_operand.vmem [shape: f32[512,32], index: 1, kind: input, shape index: {}]
  %s2 = inlined_call_operand.vmem [shape: f32[1,32], index: 2, kind: input, shape index: {}]
  %s3 = inlined_call_operand.vmem [shape: f32[32,16], index: 3, kind: input, shape index: {}]
  %s4 = inlined_call_operand.vmem [shape: f32[1,16], index: 4, kind: input, shape index: {}]
  %s5 = inlined_call_operand.vmem [shape: f32[16,4], index: 5, kind: input, shape index: {}]
  %s6 = inlined_call_operand.vmem [shape: f32[1,4], index: 6, kind: input, shape index: {}]
  %s7 = inlined_call_operand.hbm [shape: f32[2,4], index: 7, kind: output, shape index: {}]
  %s8 = sld [smem:[#allocation0]]
  $region38: #{neural_network_forward.5} parent=0
    _
  %s10 = ssub.s32 1, %s8
  %s11 = scalar_select 0, %s10, %s8
  $region1: #{neural_network_forward.5} parent=0
    #allocation2 [shape = 'u8[1024]{0}', space=vmem, size = 0x400, scoped, tag = 'output window, operand 0, single buffered']
    #allocation3 [shape = 's32[1]{0}', space=sflag, size = 0x4, scoped, tag = 'scoped memory for neural_network_forward.5']
    %12 = vsyncpa [#allocation3], 0
    // Predicated region
    $region2: #{neural_network_forward.5} parent=1 // pred_check
      _
    $region3: #{neural_network_forward.5} parent=1 // pred_check_branch
      %14 = sbr.rel (0) target = $region5
    $region4: #{neural_network_forward.5} parent=1 // pred_region
      _
    $region5: #{neural_network_forward.5} parent=1 // pred_fallthru
      _
    // Predicated region
    $region6: #{neural_network_forward.5} parent=1 // pred_check
      _
    $region7: #{neural_network_forward.5} parent=1 // pred_check_branch
      %16 = sbr.rel (0) target = $region9
    $region8: #{neural_network_forward.5} parent=1 // pred_region
      _
    $region9: #{neural_network_forward.5} parent=1 // pred_fallthru
      _
    // Predicated region
    $region10: #{neural_network_forward.5} parent=1 // pred_check
      _
    $region11: #{neural_network_forward.5} parent=1 // pred_check_branch
      %18 = sbr.rel (0) target = $region13
    $region12: #{neural_network_forward.5} parent=1 // pred_region
      _
    $region13: #{neural_network_forward.5} parent=1 // pred_fallthru
      _
    // Predicated region
    $region14: #{neural_network_forward.5} parent=1 // pred_check
      _
    $region15: #{neural_network_forward.5} parent=1 // pred_check_branch
      %20 = sbr.rel (0) target = $region17
    $region16: #{neural_network_forward.5} parent=1 // pred_region
      _
    $region17: #{neural_network_forward.5} parent=1 // pred_fallthru
      _
    // Predicated region
    $region18: #{neural_network_forward.5} parent=1 // pred_check
      _
    $region19: #{neural_network_forward.5} parent=1 // pred_check_branch
      %22 = sbr.rel (0) target = $region21
    $region20: #{neural_network_forward.5} parent=1 // pred_region
      _
    $region21: #{neural_network_forward.5} parent=1 // pred_fallthru
      _
    // Predicated region
    $region22: #{neural_network_forward.5} parent=1 // pred_check
      _
    $region23: #{neural_network_forward.5} parent=1 // pred_check_branch
      %24 = sbr.rel (0) target = $region25
    $region24: #{neural_network_forward.5} parent=1 // pred_region
      _
    $region25: #{neural_network_forward.5} parent=1 // pred_fallthru
      _
    // Predicated region
    $region26: #{neural_network_forward.5} parent=1 // pred_check
      _
    $region27: #{neural_network_forward.5} parent=1 // pred_check_branch
      %26 = sbr.rel (0) target = $region29
    $region28: #{neural_network_forward.5} parent=1 // pred_region
      _
    $region29: #{neural_network_forward.5} parent=1 // pred_fallthru
      _
    %v27 = vld [vmem:[%s0] sm:$0xff]
    %v28 = vld [vmem:[%s1] sm:$0xff]
    %v29 = vld [vmem:[%s1 + $0x8] sm:$0xff]
    %v30 = vld [vmem:[%s1 + $0x10] sm:$0xff]
    %v31 = vld [vmem:[%s1 + $0x18] sm:$0xff]
    %v32 = vld [vmem:[%s1 + $0x20] sm:$0xff]
    %v33 = vld [vmem:[%s1 + $0x28] sm:$0xff]
    %v34 = vld [vmem:[%s1 + $0x30] sm:$0xff]
    %v35 = vld [vmem:[%s1 + $0x38] sm:$0xff]
    %v36 = vld [vmem:[%s1 + $0x40] sm:$0xff]
    %v37 = vld [vmem:[%s1 + $0x48] sm:$0xff]
    %v38 = vld [vmem:[%s1 + $0x50] sm:$0xff]
    %v39 = vld [vmem:[%s1 + $0x58] sm:$0xff]
    %v40 = vld [vmem:[%s1 + $0x60] sm:$0xff]
    %v41 = vld [vmem:[%s1 + $0x68] sm:$0xff]
    %v42 = vld [vmem:[%s1 + $0x70] sm:$0xff]
    %v43 = vld [vmem:[%s1 + $0x78] sm:$0xff]
    %v44 = vld [vmem:[%s1 + $0x80] sm:$0xff]
    %v45 = vld [vmem:[%s1 + $0x88] sm:$0xff]
    %v46 = vld [vmem:[%s1 + $0x90] sm:$0xff]
    %v47 = vld [vmem:[%s1 + $0x98] sm:$0xff]
    %v48 = vld [vmem:[%s1 + $0xa0] sm:$0xff]
    %v49 = vld [vmem:[%s1 + $0xa8] sm:$0xff]
    %v50 = vld [vmem:[%s1 + $0xb0] sm:$0xff]
    %v51 = vld [vmem:[%s1 + $0xb8] sm:$0xff]
    %v52 = vld [vmem:[%s1 + $0xc0] sm:$0xff]
    %v53 = vld [vmem:[%s1 + $0xc8] sm:$0xff]
    %v54 = vld [vmem:[%s1 + $0xd0] sm:$0xff]
    %v55 = vld [vmem:[%s1 + $0xd8] sm:$0xff]
    %v56 = vld [vmem:[%s1 + $0xe0] sm:$0xff]
    %v57 = vld [vmem:[%s1 + $0xe8] sm:$0xff]
    %v58 = vld [vmem:[%s1 + $0xf0] sm:$0xff]
    %v59 = vld [vmem:[%s1 + $0xf8] sm:$0xff]
    %v60 = vld [vmem:[%s1 + $0x100] sm:$0xff]
    %v61 = vld [vmem:[%s1 + $0x108] sm:$0xff]
    %v62 = vld [vmem:[%s1 + $0x110] sm:$0xff]
    %v63 = vld [vmem:[%s1 + $0x118] sm:$0xff]
    %v64 = vld [vmem:[%s1 + $0x120] sm:$0xff]
    %v65 = vld [vmem:[%s1 + $0x128] sm:$0xff]
    %v66 = vld [vmem:[%s1 + $0x130] sm:$0xff]
    %v67 = vld [vmem:[%s1 + $0x138] sm:$0xff]
    %v68 = vld [vmem:[%s1 + $0x140] sm:$0xff]
    %v69 = vld [vmem:[%s1 + $0x148] sm:$0xff]
    %v70 = vld [vmem:[%s1 + $0x150] sm:$0xff]
    %v71 = vld [vmem:[%s1 + $0x158] sm:$0xff]
    %v72 = vld [vmem:[%s1 + $0x160] sm:$0xff]
    %v73 = vld [vmem:[%s1 + $0x168] sm:$0xff]
    %v74 = vld [vmem:[%s1 + $0x170] sm:$0xff]
    %v75 = vld [vmem:[%s1 + $0x178] sm:$0xff]
    %v76 = vld [vmem:[%s1 + $0x180] sm:$0xff]
    %v77 = vld [vmem:[%s1 + $0x188] sm:$0xff]
    %v78 = vld [vmem:[%s1 + $0x190] sm:$0xff]
    %v79 = vld [vmem:[%s1 + $0x198] sm:$0xff]
    %v80 = vld [vmem:[%s1 + $0x1a0] sm:$0xff]
    %v81 = vld [vmem:[%s1 + $0x1a8] sm:$0xff]
    %v82 = vld [vmem:[%s1 + $0x1b0] sm:$0xff]
    %v83 = vld [vmem:[%s1 + $0x1b8] sm:$0xff]
    %v84 = vld [vmem:[%s1 + $0x1c0] sm:$0xff]
    %v85 = vld [vmem:[%s1 + $0x1c8] sm:$0xff]
    %v86 = vld [vmem:[%s1 + $0x1d0] sm:$0xff]
    %v87 = vld [vmem:[%s1 + $0x1d8] sm:$0xff]
    %v88 = vld [vmem:[%s1 + $0x1e0] sm:$0xff]
    %v89 = vld [vmem:[%s1 + $0x1e8] sm:$0xff]
    %v90 = vld [vmem:[%s1 + $0x1f0] sm:$0xff]
    %v91 = vld [vmem:[%s1 + $0x1f8] sm:$0xff]
    %v92 = vld [vmem:[%s2] sm:$0x1]
    %v94 = vperm.slane %v92, 0
    %97 = vst [vmem:[#allocation1] ss:$4 sm:$0xff] %v27
    %v98 = vld.sshfl [vmem:[#allocation1] sm:$0xff pattern:$0x73625140]
    %v99 = vld.sshfl [vmem:[#allocation1 + $0x8] sm:$0xff pattern:$0x73625140]
    %v100 = vld.sshfl [vmem:[#allocation1 + $0x10] sm:$0xff pattern:$0x73625140]
    %v101 = vld.sshfl [vmem:[#allocation1 + $0x18] sm:$0xff pattern:$0x73625140]
    %106 = vmatpush.msra.mxu0 %v43
    %107 = vmatpush.msra.mxu0 %v42
    %108 = vmatpush.msra.mxu0 %v41
    %109 = vmatpush.msra.mxu0 %v40
    %110 = vmatpush.msra.mxu0 %v39
    %111 = vmatpush.msra.mxu0 %v38
    %112 = vmatpush.msra.mxu0 %v37
    %113 = vmatpush.msra.mxu0 %v36
    %114 = vmatpush.msra.mxu0 %v35
    %115 = vmatpush.msra.mxu0 %v34
    %116 = vmatpush.msra.mxu0 %v33
    %117 = vmatpush.msra.mxu0 %v32
    %118 = vmatpush.msra.mxu0 %v31
    %119 = vmatpush.msra.mxu0 %v30
    %120 = vmatpush.msra.mxu0 %v29
    %121 = vmatpush.msra.mxu0 %v28
    %122 = vmatmul.f32.gmra.mxu0 %v98
    %v123 = vpop.f32.mrf.mxu0
    %v124 = vadd.f32 %v94, %v123
    %125 = vdwg.mxu0
    %126 = vmatpush.msra.mxu0 %v59
    %127 = vmatpush.msra.mxu0 %v58
    %128 = vmatpush.msra.mxu0 %v57
    %129 = vmatpush.msra.mxu0 %v56
    %130 = vmatpush.msra.mxu0 %v55
    %131 = vmatpush.msra.mxu0 %v54
    %132 = vmatpush.msra.mxu0 %v53
    %133 = vmatpush.msra.mxu0 %v52
    %134 = vmatpush.msra.mxu0 %v51
    %135 = vmatpush.msra.mxu0 %v50
    %136 = vmatpush.msra.mxu0 %v49
    %137 = vmatpush.msra.mxu0 %v48
    %138 = vmatpush.msra.mxu0 %v47
    %139 = vmatpush.msra.mxu0 %v46
    %140 = vmatpush.msra.mxu0 %v45
    %141 = vmatpush.msra.mxu0 %v44
    %142 = vmatmul.f32.gmra.mxu0 %v99
    %v143 = vpop.f32.mrf.mxu0
    %v144 = vadd.f32 %v124, %v143
    %145 = vdwg.mxu0
    %146 = vmatpush.msra.mxu0 %v75
    %147 = vmatpush.msra.mxu0 %v74
    %148 = vmatpush.msra.mxu0 %v73
    %149 = vmatpush.msra.mxu0 %v72
    %150 = vmatpush.msra.mxu0 %v71
    %151 = vmatpush.msra.mxu0 %v70
    %152 = vmatpush.msra.mxu0 %v69
    %153 = vmatpush.msra.mxu0 %v68
    %154 = vmatpush.msra.mxu0 %v67
    %155 = vmatpush.msra.mxu0 %v66
    %156 = vmatpush.msra.mxu0 %v65
    %157 = vmatpush.msra.mxu0 %v64
    %158 = vmatpush.msra.mxu0 %v63
    %159 = vmatpush.msra.mxu0 %v62
    %160 = vmatpush.msra.mxu0 %v61
    %161 = vmatpush.msra.mxu0 %v60
    %162 = vmatmul.f32.gmra.mxu0 %v100
    %v163 = vpop.f32.mrf.mxu0
    %v164 = vadd.f32 %v144, %v163
    %165 = vdwg.mxu0
    %166 = vmatpush.msra.mxu0 %v91
    %167 = vmatpush.msra.mxu0 %v90
    %168 = vmatpush.msra.mxu0 %v89
    %169 = vmatpush.msra.mxu0 %v88
    %170 = vmatpush.msra.mxu0 %v87
    %171 = vmatpush.msra.mxu0 %v86
    %172 = vmatpush.msra.mxu0 %v85
    %173 = vmatpush.msra.mxu0 %v84
    %174 = vmatpush.msra.mxu0 %v83
    %175 = vmatpush.msra.mxu0 %v82
    %176 = vmatpush.msra.mxu0 %v81
    %177 = vmatpush.msra.mxu0 %v80
    %178 = vmatpush.msra.mxu0 %v79
    %179 = vmatpush.msra.mxu0 %v78
    %180 = vmatpush.msra.mxu0 %v77
    %181 = vmatpush.msra.mxu0 %v76
    %182 = vmatmul.f32.gmra.mxu0 %v101
    %v183 = vpop.f32.mrf.mxu0
    %v184 = vadd.f32 %v164, %v183
    %185 = vdwg.mxu0
    %v186 = vmax.f32 %v184, 0.0
    %v187 = vld [vmem:[%s3] sm:$0xff]
    %v188 = vld [vmem:[%s3 + $0x8] sm:$0xff]
    %v189 = vld [vmem:[%s3 + $0x10] sm:$0xff]
    %v190 = vld [vmem:[%s3 + $0x18] sm:$0xff]
    %v191 = vld [vmem:[%s4] sm:$0x1]
    %v193 = vperm.slane %v191, 0
    %vm195 = vcmask 261120
    %v197 = vsel %vm195, %v186, 0
    %199 = vmatpush.msra.mxu0 0.0
    %200 = vmatpush.msra.mxu0 0.0
    %201 = vmatpush.msra.mxu0 0.0
    %202 = vmatpush.msra.mxu0 0.0
    %203 = vmatpush.msra.mxu0 0.0
    %204 = vmatpush.msra.mxu0 0.0
    %205 = vmatpush.msra.mxu0 0.0
    %206 = vmatpush.msra.mxu0 0.0
    %207 = vmatpush.msra.mxu0 0.0
    %208 = vmatpush.msra.mxu0 0.0
    %209 = vmatpush.msra.mxu0 0.0
    %210 = vmatpush.msra.mxu0 0.0
    %211 = vmatpush.msra.mxu0 %v190
    %212 = vmatpush.msra.mxu0 %v189
    %213 = vmatpush.msra.mxu0 %v188
    %214 = vmatpush.msra.mxu0 %v187
    %215 = vmatmul.f32.gmra.mxu0 %v197
    %v216 = vpop.f32.mrf.mxu0
    %v217 = vadd.f32 %v193, %v216
    %218 = vdwg.mxu0
    %v219 = vmax.f32 %v217, 0.0
    %v220 = vld [vmem:[%s5] sm:$0xff]
    %v221 = vld [vmem:[%s5 + $0x8] sm:$0xff]
    %v222 = vld [vmem:[%s6] sm:$0x1]
    %v224 = vperm.slane %v222, 0
    %vm226 = vcmask 130048
    %v228 = vsel %vm226, %v219, 0
    %230 = vmatpush.msra.mxu0 0.0
    %231 = vmatpush.msra.mxu0 0.0
    %232 = vmatpush.msra.mxu0 0.0
    %233 = vmatpush.msra.mxu0 0.0
    %234 = vmatpush.msra.mxu0 0.0
    %235 = vmatpush.msra.mxu0 0.0
    %236 = vmatpush.msra.mxu0 0.0
    %237 = vmatpush.msra.mxu0 0.0
    %238 = vmatpush.msra.mxu0 0.0
    %239 = vmatpush.msra.mxu0 0.0
    %240 = vmatpush.msra.mxu0 0.0
    %241 = vmatpush.msra.mxu0 0.0
    %242 = vmatpush.msra.mxu0 0.0
    %243 = vmatpush.msra.mxu0 0.0
    %244 = vmatpush.msra.mxu0 %v221
    %245 = vmatpush.msra.mxu0 %v220
    %246 = vmatmul.f32.gmra.mxu0 %v228
    %v247 = vpop.f32.mrf.mxu0
    %v248 = vadd.f32 %v224, %v247
    %249 = vdwg.mxu0
    %vm250 = vcmask 25600
    %251 = vst.msk [vmem:[#allocation2] sm:$0x3] %vm250, %v248
    // Predicated region
    $region30: #{neural_network_forward.5} parent=1 // pred_check
      _
    $region31: #{neural_network_forward.5} parent=1 // pred_check_branch
      %253 = sbr.rel (0) target = $region33
    $region32: #{neural_network_forward.5} parent=1 // pred_region
      %255 = vsyncadd [#allocation3], 0
      %s257 = sshll.u32 [#allocation2], 4
      %s258 = int_to_ptr.vmem [resolvable:$true] %s257
      %s259 = sshll.u32 %s7, 4
      %s260 = int_to_ptr.hbm [resolvable:$true] %s259
      %262 = dma.vmem_to_hbm [thread:$0]  %s258, 32, %s260, [#allocation3]
    $region33: #{neural_network_forward.5} parent=1 // pred_fallthru
      _
    // Predicated region
    $region34: #{neural_network_forward.5} parent=1 // pred_check
      _
    $region35: #{neural_network_forward.5} parent=1 // pred_check_branch
      %264 = sbr.rel (0) target = $region37
    $region36: #{neural_network_forward.5} parent=1 // pred_region
      %266 = dma.done [#allocation3], 32
    $region37: #{neural_network_forward.5} parent=1 // pred_fallthru
      _
    %267 = vsyncpa [#allocation3], 1

</llo_original>
